<compile_context>
chip_gen: v7x
topology: tpu7x:2x2x1
jax: 0.10.0
libtpu: 0.0.40
codegen_flags: <defaults>
</compile_context>

<pallas_src>
import numpy as np
import jax
import jax.numpy as jnp
from jax import lax
from jax.experimental import pallas as pl
from jax.experimental.pallas import tpu as pltpu

N_QBITS = 3
IMG = 10                        # 10x10 input
CONV_K = 4                      # conv kernel -> 7x7 conv output
CONV_OUT = IMG - CONV_K + 1     # 7
POOL_OUT = CONV_OUT // 2        # 3 (maxpool 2, stride 2)
N_POOL = POOL_OUT * POOL_OUT    # 9
FC_IN = 3 * N_POOL              # 27  (3 channels * 3 * 3)
GROUP = 32                      # 27 pooled features + 5 pad -> lane aligned group
N_OFF = 4                       # 4 positions inside each 2x2 pool window
WIDE = N_OFF * GROUP            # 128 (lane-dense matmul N)
BIAS_COL = GROUP - 1            # pad column carrying the constant 1.0 (fc bias lane)
TAB_ROWS = 16                   # packed constant-table rows

_NT_DIMS = (((1,), (1,)), ((), ()))   # contract both operands on their last dim (A @ B^T)


def _round_up(a, m):
    return ((a + m - 1) // m) * m


def _fold_conv_into_weight(wconv):
    """Scatter conv1 weight (3,1,4,4) into a (100, 128) matrix so that
    xflat(B,100) @ Wbig gives conv outputs at all 4 pool-window offsets.
    Column = k*32 + c*9 + (ph*3 + pw): pooled column order == PyTorch flatten (C,PH,PW);
    columns 27..31 of each 32-wide group are left zero (padding / bias lane)."""
    rows, cols, vidx = [], [], []
    for k in range(N_OFF):
        dh, dw = k // 2, k % 2
        for s in range(N_POOL):
            ph, pw = s // POOL_OUT, s % POOL_OUT
            oh, ow = 2 * ph + dh, 2 * pw + dw          # conv output position
            for c in range(3):
                for kh in range(CONV_K):
                    for kw in range(CONV_K):
                        rows.append((oh + kh) * IMG + (ow + kw))
                        cols.append(k * GROUP + c * N_POOL + s)
                        vidx.append(c * CONV_K * CONV_K + kh * CONV_K + kw)
    wflat = jnp.asarray(wconv, jnp.float32).reshape(3 * CONV_K * CONV_K)
    vals = wflat[np.asarray(vidx)]
    wbig = jnp.zeros((IMG * IMG, WIDE), jnp.float32)
    # NOTE: for training (weights changing every step) precompute this once per update.
    return wbig.at[np.asarray(rows), np.asarray(cols)].set(vals)


def _pack_const_table(bconv, wfc, bfc):
    """Single (16,128) f32 table holding every tiny constant:
       row 0        : folded conv bias per wide column, + 1.0 in each group's BIAS_COL
                      (relu(0*x + 1) = 1 -> a constant-1 pooled lane that carries bfc)
       rows 8..10   : fc1 weight rows (27 cols used) with fc1 bias in BIAS_COL
       everything else zero."""
    tab = np.zeros((TAB_ROWS, WIDE), np.float32)
    bconv = np.asarray(bconv, np.float32)
    wfc = np.asarray(wfc, np.float32)
    bfc = np.asarray(bfc, np.float32)
    for k in range(N_OFF):
        for c in range(3):
            tab[0, k * GROUP + c * N_POOL:k * GROUP + (c + 1) * N_POOL] = bconv[c]
        tab[0, k * GROUP + BIAS_COL] = 1.0
    tab[8:8 + N_QBITS, 0:FC_IN] = wfc
    tab[8:8 + N_QBITS, BIAS_COL] = bfc
    return jnp.asarray(tab)


def _net_kernel(x_ref, wbig_ref, tab_ref, out_ref):
    # conv1 at all 4 pool-window offsets: one (bt,100)x(100,128) bf16 MXU matmul, f32 accum.
    xb = x_ref[...].astype(jnp.bfloat16)                                   # in-kernel bf16 cast
    y = jnp.dot(xb, wbig_ref[...], preferred_element_type=jnp.float32)     # (bt, 128)
    y = jnp.maximum(y + tab_ref[0:1, :], 0.0)                              # conv bias + ReLU

    # 2x2 max-pool == elementwise max over the 4 lane-aligned groups of 32 columns.
    pooled = jnp.maximum(jnp.maximum(y[:, 0:GROUP], y[:, GROUP:2 * GROUP]),
                         jnp.maximum(y[:, 2 * GROUP:3 * GROUP], y[:, 3 * GROUP:WIDE]))  # (bt,32)

    # fc1 computed transposed (zt[i,b] = sum_k wfc[i,k]*pooled[b,k]; bias rides lane 31),
    # so the rest of the epilogue is lane-dense in the batch dimension.
    wfc = tab_ref[8:16, 0:GROUP]                                           # (8, 32), rows 0..2 used
    zt = lax.dot_general(wfc, pooled, _NT_DIMS,
                         preferred_element_type=jnp.float32)               # (8, bt)

    # QNN: ZZFeatureMap(3, reps=2) + identity ansatz + <Z@Z@Z> reduces exactly to
    #     <ZZZ> = cos(2 z0) * cos(2 z1) * cos(2 z2)
    # (ZZ entangling phases are bit-complement invariant and cancel; verified in the test
    #  against the full statevector simulation).
    c = jnp.cos(2.0 * zt)                                                  # (8, bt) lane-dense EUP
    e = c[0:1, :] * c[1:2, :] * c[2:3, :]                                  # (1, bt)
    out_ref[...] = jnp.concatenate([e, 1.0 - e], axis=0)                   # (2, bt) one dense store


def net_forward_pallas(x, wconv, bconv, wfc, bfc, *, batch_tile=4096):
    """x: (B,1,10,10) NCHW float. Returns out (B,2) == Net.forward(x)."""
    B = x.shape[0]
    xf = x.reshape(B, IMG * IMG).astype(jnp.float32)      # f32 straight into the kernel

    wbig = _fold_conv_into_weight(wconv).astype(jnp.bfloat16)   # (100, 128) bf16
    tab = _pack_const_table(bconv, wfc, bfc)                    # (16, 128) f32

    # Batch tiling: bt multiple of 256, >=2 grid steps for sizeable batches (v7x megacore),
    # and at most ~one tile of padding waste.
    batch_tile = max(256, _round_up(batch_tile, 256))
    min_steps = 2 if B >= 512 else 1
    n_steps = max(min_steps, pl.cdiv(B, batch_tile))
    bt = min(batch_tile, _round_up(pl.cdiv(B, n_steps), 256))
    n_steps = pl.cdiv(B, bt)
    Bp = n_steps * bt
    if Bp != B:
        xf = jnp.pad(xf, ((0, Bp - B), (0, 0)))

    flops = 2 * Bp * (IMG * IMG * WIDE + 8 * GROUP) + 8 * Bp
    bytes_accessed = (Bp * (IMG * IMG * 4 + 2 * 4)
                      + IMG * IMG * WIDE * 2 + TAB_ROWS * WIDE * 4)

    out_t = pl.pallas_call(
        _net_kernel,
        out_shape=jax.ShapeDtypeStruct((2, Bp), jnp.float32),    # transposed: lane-dense writes
        grid_spec=pltpu.PrefetchScalarGridSpec(
            num_scalar_prefetch=0,
            grid=(n_steps,),
            in_specs=[
                pl.BlockSpec((bt, IMG * IMG), lambda i: (i, 0)),      # x (f32, bf16 cast in-kernel)
                pl.BlockSpec((IMG * IMG, WIDE), lambda i: (0, 0)),    # folded conv weight (bf16)
                pl.BlockSpec((TAB_ROWS, WIDE), lambda i: (0, 0)),     # packed bias / fc table (f32)
            ],
            out_specs=pl.BlockSpec((2, bt), lambda i: (0, i)),
        ),
        compiler_params=pltpu.CompilerParams(
            dimension_semantics=("parallel",),                    # shard batch across TCs (v7x)
            vmem_limit_bytes=32 * 1024 * 1024),
        cost_estimate=pl.CostEstimate(flops=flops, transcendentals=8 * Bp,
                                      bytes_accessed=bytes_accessed),
    )(xf, wbig, tab)
    return out_t[:, :B].T                                        # (B, 2)


# ---------------- plain-JAX reference (correctness check) ----------------

def _qnn_constants():
    """Constants for the full 8-amplitude ZZFeatureMap(reps=2) + <Z@Z@Z> statevector sim."""
    b = np.arange(8)
    bits = ((b[None, :] >> np.arange(N_QBITS)[:, None]) & 1).astype(np.float32)      # (3, 8)
    xors = np.stack([np.logical_xor(bits[0], bits[1]),
                     np.logical_xor(bits[0], bits[2]),
                     np.logical_xor(bits[1], bits[2])]).astype(np.float32)            # (3, 8)
    hsign = ((-1.0) ** np.array([[bin(i & j).count("1") for j in b] for i in b],
                                dtype=np.float32)).astype(np.float32)                 # (8, 8)
    parity = (((-1.0) ** bits.sum(0)) / 64.0).astype(np.float32).reshape(1, 8)        # (1, 8)
    return (jnp.asarray(bits), jnp.asarray(xors), jnp.asarray(hsign), jnp.asarray(parity))


def _qnn_reference(z):
    """Exact statevector expectation <Z@Z@Z> for |psi> = D(z) H^3 D(z) H^3 |000>."""
    hi = jax.lax.Precision.HIGHEST
    bits, xors, hsign, parity = _qnn_constants()
    u = jnp.pi - z
    theta = jnp.dot(z, bits, precision=hi)
    theta = theta + (u[:, 0:1] * u[:, 1:2]) * xors[0:1, :]
    theta = theta + (u[:, 0:1] * u[:, 2:3]) * xors[1:2, :]
    theta = theta + (u[:, 1:2] * u[:, 2:3]) * xors[2:3, :]
    theta = 2.0 * theta
    c = jnp.dot(jnp.cos(theta), hsign, precision=hi)
    s = jnp.dot(jnp.sin(theta), hsign, precision=hi)
    return jnp.sum((c * c + s * s) * parity, axis=-1, keepdims=True)


def net_forward_reference(x, wconv, bconv, wfc, bfc):
    hi = jax.lax.Precision.HIGHEST
    y = jax.lax.conv_general_dilated(x, wconv, (1, 1), "VALID",
                                     dimension_numbers=("NCHW", "OIHW", "NCHW"),
                                     precision=hi)
    y = jax.nn.relu(y + bconv.reshape(1, 3, 1, 1))
    y = jax.lax.reduce_window(y, -jnp.inf, jax.lax.max, (1, 1, 2, 2), (1, 1, 2, 2), "VALID")
    y = y.reshape(x.shape[0], -1)
    z = jnp.dot(y, wfc.T, precision=hi) + bfc
    e = _qnn_reference(z)
    return jnp.concatenate([e, 1.0 - e], axis=-1)


if __name__ == "__main__":
    key = jax.random.PRNGKey(0)
    kx, kwc, kbc, kwf, kbf = jax.random.split(key, 5)
    B = 2
    x = jax.random.normal(kx, (B, 1, IMG, IMG), jnp.float32)

    # Deterministic parameters (PyTorch shapes: Conv2d(1,3,4), Linear(27,3))
    wconv = jax.random.uniform(kwc, (3, 1, CONV_K, CONV_K), jnp.float32, -0.25, 0.25)
    bconv = jax.random.uniform(kbc, (3,), jnp.float32, -0.25, 0.25)
    wfc = jax.random.uniform(kwf, (N_QBITS, FC_IN), jnp.float32, -0.19, 0.19)
    bfc = jax.random.uniform(kbf, (N_QBITS,), jnp.float32, -0.19, 0.19)

    # Pallas fused forward pass
    out = net_forward_pallas(x, wconv, bconv, wfc, bfc)
    out = jax.block_until_ready(out)

    # Reference uses the same bf16-rounded conv operands the kernel feeds the MXU,
    # and the FULL statevector QNN (independently validating the closed-form epilogue).
    x_q = x.astype(jnp.bfloat16).astype(jnp.float32)
    wconv_q = wconv.astype(jnp.bfloat16).astype(jnp.float32)
    out_ref = net_forward_reference(x_q, wconv_q, bconv, wfc, bfc)

    np.testing.assert_allclose(np.asarray(out), np.asarray(out_ref), rtol=2e-3, atol=2e-3)
    assert out.shape == (B, 2)
    print("KERNEL_OK")
</pallas_src>

<mosaic_0001>
module attributes {stable_mosaic.version = 11 : i64} {
  func.func @_net_kernel(%arg0: i32, %arg1: memref<256x100xf32, #tpu.memory_space<vmem>>, %arg2: memref<100x128xbf16, #tpu.memory_space<vmem>>, %arg3: memref<16x128xf32, #tpu.memory_space<vmem>>, %arg4: memref<2x256xf32, #tpu.memory_space<vmem>>) attributes {dimension_semantics = [#tpu.dimension_semantics<parallel>], iteration_bounds = array<i64: 1>, scalar_prefetch = 0 : i64, scratch_operands = 0 : i64, tpu.core_type = #tpu.core_type<tc>, window_params = [{transform_indices = @transform_0, window_bounds = array<i64: 256, 100>}, {pipeline_mode = #tpu.pipeline_mode<synchronous>, transform_indices = @transform_1, window_bounds = array<i64: 100, 128>}, {pipeline_mode = #tpu.pipeline_mode<synchronous>, transform_indices = @transform_2, window_bounds = array<i64: 16, 128>}, {transform_indices = @transform_3, window_bounds = array<i64: 2, 256>}]} {
    %c0 = arith.constant 0 : index
    %c0_0 = arith.constant 0 : index
    %0 = vector.load %arg1[%c0, %c0_0] : memref<256x100xf32, #tpu.memory_space<vmem>>, vector<256x100xf32>
    %1 = arith.truncf %0 : vector<256x100xf32> to vector<256x100xbf16>
    %c0_1 = arith.constant 0 : index
    %c0_2 = arith.constant 0 : index
    %2 = vector.load %arg2[%c0_1, %c0_2] : memref<100x128xbf16, #tpu.memory_space<vmem>>, vector<100x128xbf16>
    %cst = arith.constant dense<0.000000e+00> : vector<256x128xf32>
    %3 = tpu.matmul %1, %2, %cst {dimension_numbers = #tpu.dot_dimension_numbers<[1], [0], [0], [1], [0, 0, 1, 1], [], []>} : vector<256x100xbf16>, vector<100x128xbf16>, vector<256x128xf32> -> vector<256x128xf32>
    %c0_3 = arith.constant 0 : index
    %c0_4 = arith.constant 0 : index
    %4 = vector.load %arg3[%c0_3, %c0_4] : memref<16x128xf32, #tpu.memory_space<vmem>>, vector<1x128xf32>
    %5 = vector.broadcast %4 : vector<1x128xf32> to vector<256x128xf32>
    %6 = arith.addf %3, %5 : vector<256x128xf32>
    %cst_5 = arith.constant 0.000000e+00 : f32
    %7 = vector.broadcast %cst_5 : f32 to vector<256x128xf32>
    %8 = arith.maximumf %6, %7 : vector<256x128xf32>
    %9 = vector.extract_strided_slice %8 {offsets = [0, 0], sizes = [256, 32], strides = [1, 1]} : vector<256x128xf32> to vector<256x32xf32>
    %10 = vector.extract_strided_slice %8 {offsets = [0, 32], sizes = [256, 32], strides = [1, 1]} : vector<256x128xf32> to vector<256x32xf32>
    %11 = arith.maximumf %9, %10 : vector<256x32xf32>
    %12 = vector.extract_strided_slice %8 {offsets = [0, 64], sizes = [256, 32], strides = [1, 1]} : vector<256x128xf32> to vector<256x32xf32>
    %13 = vector.extract_strided_slice %8 {offsets = [0, 96], sizes = [256, 32], strides = [1, 1]} : vector<256x128xf32> to vector<256x32xf32>
    %14 = arith.maximumf %12, %13 : vector<256x32xf32>
    %15 = arith.maximumf %11, %14 : vector<256x32xf32>
    %c8 = arith.constant 8 : index
    %c0_6 = arith.constant 0 : index
    %16 = vector.load %arg3[%c8, %c0_6] : memref<16x128xf32, #tpu.memory_space<vmem>>, vector<8x32xf32>
    %cst_7 = arith.constant dense<0.000000e+00> : vector<8x256xf32>
    %17 = tpu.matmul %16, %15, %cst_7 {dimension_numbers = #tpu.dot_dimension_numbers<[1], [1], [0], [0], [0, 0, 1, 0], [], []>} : vector<8x32xf32>, vector<256x32xf32>, vector<8x256xf32> -> vector<8x256xf32>
    %cst_8 = arith.constant 2.000000e+00 : f32
    %18 = vector.broadcast %cst_8 : f32 to vector<8x256xf32>
    %19 = arith.mulf %18, %17 : vector<8x256xf32>
    %20 = math.cos %19 : vector<8x256xf32>
    %21 = vector.extract_strided_slice %20 {offsets = [0, 0], sizes = [1, 256], strides = [1, 1]} : vector<8x256xf32> to vector<1x256xf32>
    %22 = vector.extract_strided_slice %20 {offsets = [1, 0], sizes = [1, 256], strides = [1, 1]} : vector<8x256xf32> to vector<1x256xf32>
    %23 = arith.mulf %21, %22 : vector<1x256xf32>
    %24 = vector.extract_strided_slice %20 {offsets = [2, 0], sizes = [1, 256], strides = [1, 1]} : vector<8x256xf32> to vector<1x256xf32>
    %25 = arith.mulf %23, %24 : vector<1x256xf32>
    %cst_9 = arith.constant 1.000000e+00 : f32
    %26 = vector.broadcast %cst_9 : f32 to vector<1x256xf32>
    %27 = arith.subf %26, %25 : vector<1x256xf32>
    %28 = tpu.concatenate %25, %27 in 0 : vector<1x256xf32>, vector<1x256xf32> -> vector<2x256xf32>
    %c0_10 = arith.constant 0 : index
    %c0_11 = arith.constant 0 : index
    %29 = vector.load %arg4[%c0_10, %c0_11] : memref<2x256xf32, #tpu.memory_space<vmem>>, vector<2x256xf32>
    tpu.vector_store %arg4[%c0_10, %c0_11], %28 {strides = array<i32>} : memref<2x256xf32, #tpu.memory_space<vmem>>, vector<2x256xf32>,
    return
  }
  func.func @transform_0(%arg0: i32) -> (i32, i32) {
    %c0_i32 = arith.constant 0 : i32
    %c0_i32_0 = arith.constant 0 : i32
    return %arg0, %c0_i32 : i32, i32
  }
  func.func @transform_1(%arg0: i32) -> (i32, i32) {
    %c0_i32 = arith.constant 0 : i32
    %c0_i32_0 = arith.constant 0 : i32
    %c0_i32_1 = arith.constant 0 : i32
    return %c0_i32, %c0_i32_0 : i32, i32
  }
  func.func @transform_2(%arg0: i32) -> (i32, i32) {
    %c0_i32 = arith.constant 0 : i32
    %c0_i32_0 = arith.constant 0 : i32
    %c0_i32_1 = arith.constant 0 : i32
    return %c0_i32, %c0_i32_0 : i32, i32
  }
  func.func @transform_3(%arg0: i32) -> (i32, i32) {
    %c0_i32 = arith.constant 0 : i32
    %c0_i32_0 = arith.constant 0 : i32
    return %c0_i32, %arg0 : i32, i32
  }
}

</mosaic_0001>

<llo_original>
// kernel: tpu_custom_call.1
$region0: #{tpu_custom_call.1}
  #allocation0 [shape = 'u32[]', space=smem, size = 0x4, offset = 0x4, fixed_abs, tag = 'smem constant byte address 0x4 - core index']
  #allocation1 [shape = 'u32[144,128]{1,0:T(1,128)}', space=vmem, size = 0x12000, scoped, tag = 'internal scratch']
  %s0 = inlined_call_operand.vmem [shape: f32[256,100], index: 0, kind: input, shape index: {}]
  %s1 = inlined_call_operand.vmem [shape: bf16[100,128], index: 1, kind: input, shape index: {}]
  %s2 = inlined_call_operand.vmem [shape: f32[16,128], index: 2, kind: input, shape index: {}]
  %s3 = inlined_call_operand.hbm [shape: f32[2,256], index: 3, kind: output, shape index: {}]
  %s4 = sld [smem:[#allocation0]]
  $region22: #{tpu_custom_call.1} parent=0
    _
  %s6 = ssub.s32 1, %s4
  %s7 = scalar_select 0, %s6, %s4
  $region1: #{tpu_custom_call.1} parent=0
    #allocation2 [shape = 'u8[2048]{0}', space=vmem, size = 0x800, scoped, tag = 'output window, operand 0, single buffered']
    #allocation3 [shape = 's32[1]{0}', space=sflag, size = 0x4, scoped, tag = 'scoped memory for tpu_custom_call.1']
    %8 = vsyncpa [#allocation3], 0
    // Predicated region
    $region2: #{tpu_custom_call.1} parent=1 // pred_check
      _
    $region3: #{tpu_custom_call.1} parent=1 // pred_check_branch
      %10 = sbr.rel (0) target = $region5
    $region4: #{tpu_custom_call.1} parent=1 // pred_region
      _
    $region5: #{tpu_custom_call.1} parent=1 // pred_fallthru
      _
    // Predicated region
    $region6: #{tpu_custom_call.1} parent=1 // pred_check
      _
    $region7: #{tpu_custom_call.1} parent=1 // pred_check_branch
      %12 = sbr.rel (0) target = $region9
    $region8: #{tpu_custom_call.1} parent=1 // pred_region
      _
    $region9: #{tpu_custom_call.1} parent=1 // pred_fallthru
      _
    // Predicated region
    $region10: #{tpu_custom_call.1} parent=1 // pred_check
      _
    $region11: #{tpu_custom_call.1} parent=1 // pred_check_branch
      %14 = sbr.rel (0) target = $region13
    $region12: #{tpu_custom_call.1} parent=1 // pred_region
      _
    $region13: #{tpu_custom_call.1} parent=1 // pred_fallthru
      _
    %v16 = vld [vmem:[%s0] sm:$0xff]
    %v17 = vld [vmem:[%s0 + $0x8] sm:$0xff]
    %v18 = vld [vmem:[%s0 + $0x10] sm:$0xff]
    %v19 = vld [vmem:[%s0 + $0x18] sm:$0xff]
    %v20 = vld [vmem:[%s0 + $0x20] sm:$0xff]
    %v21 = vld [vmem:[%s0 + $0x28] sm:$0xff]
    %v22 = vld [vmem:[%s0 + $0x30] sm:$0xff]
    %v23 = vld [vmem:[%s0 + $0x38] sm:$0xff]
    %v24 = vld [vmem:[%s0 + $0x40] sm:$0xff]
    %v25 = vld [vmem:[%s0 + $0x48] sm:$0xff]
    %v26 = vld [vmem:[%s0 + $0x50] sm:$0xff]
    %v27 = vld [vmem:[%s0 + $0x58] sm:$0xff]
    %v28 = vld [vmem:[%s0 + $0x60] sm:$0xff]
    %v29 = vld [vmem:[%s0 + $0x68] sm:$0xff]
    %v30 = vld [vmem:[%s0 + $0x70] sm:$0xff]
    %v31 = vld [vmem:[%s0 + $0x78] sm:$0xff]
    %v32 = vld [vmem:[%s0 + $0x80] sm:$0xff]
    %v33 = vld [vmem:[%s0 + $0x88] sm:$0xff]
    %v34 = vld [vmem:[%s0 + $0x90] sm:$0xff]
    %v35 = vld [vmem:[%s0 + $0x98] sm:$0xff]
    %v36 = vld [vmem:[%s0 + $0xa0] sm:$0xff]
    %v37 = vld [vmem:[%s0 + $0xa8] sm:$0xff]
    %v38 = vld [vmem:[%s0 + $0xb0] sm:$0xff]
    %v39 = vld [vmem:[%s0 + $0xb8] sm:$0xff]
    %v40 = vld [vmem:[%s0 + $0xc0] sm:$0xff]
    %v41 = vld [vmem:[%s0 + $0xc8] sm:$0xff]
    %v42 = vld [vmem:[%s0 + $0xd0] sm:$0xff]
    %v43 = vld [vmem:[%s0 + $0xd8] sm:$0xff]
    %v44 = vld [vmem:[%s0 + $0xe0] sm:$0xff]
    %v45 = vld [vmem:[%s0 + $0xe8] sm:$0xff]
    %v46 = vld [vmem:[%s0 + $0xf0] sm:$0xff]
    %v47 = vld [vmem:[%s0 + $0xf8] sm:$0xff]
    %v48 = vpack.c.bf16 %v17, %v16
    %v49 = vpack.c.bf16 %v19, %v18
    %v50 = vpack.c.bf16 %v21, %v20
    %v51 = vpack.c.bf16 %v23, %v22
    %v52 = vpack.c.bf16 %v25, %v24
    %v53 = vpack.c.bf16 %v27, %v26
    %v54 = vpack.c.bf16 %v29, %v28
    %v55 = vpack.c.bf16 %v31, %v30
    %v56 = vpack.c.bf16 %v33, %v32
    %v57 = vpack.c.bf16 %v35, %v34
    %v58 = vpack.c.bf16 %v37, %v36
    %v59 = vpack.c.bf16 %v39, %v38
    %v60 = vpack.c.bf16 %v41, %v40
    %v61 = vpack.c.bf16 %v43, %v42
    %v62 = vpack.c.bf16 %v45, %v44
    %v63 = vpack.c.bf16 %v47, %v46
    %v64 = vld [vmem:[%s1] sm:$0xf]
    %v65 = vld [vmem:[%s1 + $0x4] sm:$0xf]
    %v66 = vld [vmem:[%s1 + $0x8] sm:$0xf]
    %v67 = vld [vmem:[%s1 + $0xc] sm:$0xf]
    %v68 = vld [vmem:[%s1 + $0x10] sm:$0xf]
    %v69 = vld [vmem:[%s1 + $0x14] sm:$0xf]
    %v70 = vld [vmem:[%s1 + $0x18] sm:$0xf]
    %v71 = vld [vmem:[%s1 + $0x1c] sm:$0xf]
    %v72 = vld [vmem:[%s1 + $0x20] sm:$0xf]
    %v73 = vld [vmem:[%s1 + $0x24] sm:$0xf]
    %v74 = vld [vmem:[%s1 + $0x28] sm:$0xf]
    %v75 = vld [vmem:[%s1 + $0x2c] sm:$0xf]
    %v76 = vld [vmem:[%s1 + $0x30] sm:$0x3]
    %v77 = vld [vmem:[%s2] sm:$0x1]
    %v78 = vlaneseq
    %v79 = vshrl.u32 %v78, 7
    %v80 = vsub.s32 0, %v79
    %v81 = vrot.slane %v77, %v80
    %v95 = vunpack.c.l.b16 %v64
    %v96 = vunpack.c.l.b16 %v65
    %v97 = vunpack.c.l.b16 %v66
    %v98 = vunpack.c.l.b16 %v67
    %v99 = vunpack.c.l.b16 %v68
    %v100 = vunpack.c.l.b16 %v69
    %v101 = vunpack.c.l.b16 %v70
    %v102 = vunpack.c.l.b16 %v71
    %v103 = vunpack.c.l.b16 %v72
    %v104 = vunpack.c.l.b16 %v73
    %v105 = vunpack.c.l.b16 %v74
    %v106 = vunpack.c.l.b16 %v75
    %v107 = vunpack.c.l.b16 %v76
    %v108 = vpack.c.b16 %v96, %v95
    %v109 = vpack.c.b16 %v98, %v97
    %v110 = vpack.c.b16 %v100, %v99
    %v111 = vpack.c.b16 %v102, %v101
    %v112 = vpack.c.b16 %v104, %v103
    %v113 = vpack.c.b16 %v106, %v105
    %v114 = vpack.c.b16 %v107, %v107
    %vm121 = vcmask 818176
    %v123 = vsel %vm121, %v48, 0
    %v126 = vsel %vm121, %v49, 0
    %v129 = vsel %vm121, %v50, 0
    %v132 = vsel %vm121, %v51, 0
    %v135 = vsel %vm121, %v52, 0
    %v138 = vsel %vm121, %v53, 0
    %v141 = vsel %vm121, %v54, 0
    %v144 = vsel %vm121, %v55, 0
    %v147 = vsel %vm121, %v56, 0
    %v150 = vsel %vm121, %v57, 0
    %v153 = vsel %vm121, %v58, 0
    %v156 = vsel %vm121, %v59, 0
    %v159 = vsel %vm121, %v60, 0
    %v162 = vsel %vm121, %v61, 0
    %v165 = vsel %vm121, %v62, 0
    %v168 = vsel %vm121, %v63, 0
    %vm170 = vcmask 1041408
    %v172 = vsel %vm170, %v114, 0
    %174 = vmatprep.subr.bf16.mxu0 0
    %175 = vmatpush1.bf16.msra.mxu0 %v108
    %176 = vmatprep.subr.bf16.mxu0 0
    %177 = vmatpush1.bf16.msra.mxu0 %v109
    %178 = vmatprep.subr.bf16.mxu0 0
    %179 = vmatpush1.bf16.msra.mxu0 %v110
    %180 = vmatprep.subr.bf16.mxu0 0
    %181 = vmatpush1.bf16.msra.mxu0 %v111
    %182 = vmatprep.subr.bf16.mxu0 0
    %183 = vmatpush1.bf16.msra.mxu0 %v112
    %184 = vmatprep.subr.bf16.mxu0 0
    %185 = vmatpush1.bf16.msra.mxu0 %v113
    %186 = vmatprep.subr.bf16.mxu0 0
    %187 = vmatpush1.bf16.msra.mxu0 %v172
    %188 = vmatprep.subr.bf16.mxu0 0
    %189 = vmatpush1.bf16.msra.mxu0 0
    %190 = vmatprep.subr.bf16.mxu0 0
    %191 = vmatpush1.bf16.msra.mxu0 0
    %192 = vmatprep.subr.bf16.mxu0 0
    %193 = vmatpush1.bf16.msra.mxu0 0
    %194 = vmatprep.subr.bf16.mxu0 0
    %195 = vmatpush1.bf16.msra.mxu0 0
    %196 = vmatprep.subr.bf16.mxu0 0
    %197 = vmatpush1.bf16.msra.mxu0 0
    %198 = vmatprep.subr.bf16.mxu0 0
    %199 = vmatpush1.bf16.msra.mxu0 0
    %200 = vmatprep.subr.bf16.mxu0 0
    %201 = vmatpush1.bf16.msra.mxu0 0
    %202 = vmatprep.subr.bf16.mxu0 0
    %203 = vmatpush1.bf16.msra.mxu0 0
    %204 = vmatprep.subr.bf16.mxu0 0
    %205 = vmatpush1.bf16.msra.mxu0 0
    %206 = vmatprep.mubr.bf16.mxu0 0
    %207 = vmatmul.mubr.bf16.gmra.mrb[0].mxu0 %v123
    %v208 = vpop.f32.mrb[0].mxu0
    %v209 = vadd.f32 %v81, %v208
    %v210 = vpop.f32.mrb[0].mxu0
    %v211 = vpop.f32.mrb[0].mxu0
    %v212 = vadd.f32 %v81, %v211
    %v213 = vpop.f32.mrb[0].mxu0
    %214 = vmatprep.mubr.bf16.mxu0 0
    %215 = vmatmul.mubr.bf16.gmra.mrb[0].mxu0 %v126
    %v216 = vpop.f32.mrb[0].mxu0
    %v217 = vadd.f32 %v81, %v216
    %v218 = vpop.f32.mrb[0].mxu0
    %v219 = vpop.f32.mrb[0].mxu0
    %v220 = vadd.f32 %v81, %v219
    %v221 = vpop.f32.mrb[0].mxu0
    %222 = vmatprep.mubr.bf16.mxu0 0
    %223 = vmatmul.mubr.bf16.gmra.mrb[0].mxu0 %v129
    %v224 = vpop.f32.mrb[0].mxu0
    %v225 = vadd.f32 %v81, %v224
    %v226 = vpop.f32.mrb[0].mxu0
    %v227 = vpop.f32.mrb[0].mxu0
    %v228 = vadd.f32 %v81, %v227
    %v229 = vpop.f32.mrb[0].mxu0
    %230 = vmatprep.mubr.bf16.mxu0 0
    %231 = vmatmul.mubr.bf16.gmra.mrb[0].mxu0 %v132
    %v232 = vpop.f32.mrb[0].mxu0
    %v233 = vadd.f32 %v81, %v232
    %v234 = vpop.f32.mrb[0].mxu0
    %v235 = vpop.f32.mrb[0].mxu0
    %v236 = vadd.f32 %v81, %v235
    %v237 = vpop.f32.mrb[0].mxu0
    %238 = vmatprep.mubr.bf16.mxu0 0
    %239 = vmatmul.mubr.bf16.gmra.mrb[0].mxu0 %v135
    %v240 = vpop.f32.mrb[0].mxu0
    %v241 = vadd.f32 %v81, %v240
    %v242 = vpop.f32.mrb[0].mxu0
    %v243 = vpop.f32.mrb[0].mxu0
    %v244 = vadd.f32 %v81, %v243
    %v245 = vpop.f32.mrb[0].mxu0
    %246 = vmatprep.mubr.bf16.mxu0 0
    %247 = vmatmul.mubr.bf16.gmra.mrb[0].mxu0 %v138
    %v248 = vpop.f32.mrb[0].mxu0
    %v249 = vadd.f32 %v81, %v248
    %v250 = vpop.f32.mrb[0].mxu0
    %v251 = vpop.f32.mrb[0].mxu0
    %v252 = vadd.f32 %v81, %v251
    %v253 = vpop.f32.mrb[0].mxu0
    %254 = vmatprep.mubr.bf16.mxu0 0
    %255 = vmatmul.mubr.bf16.gmra.mrb[0].mxu0 %v141
    %v256 = vpop.f32.mrb[0].mxu0
    %v257 = vadd.f32 %v81, %v256
    %v258 = vpop.f32.mrb[0].mxu0
    %v259 = vpop.f32.mrb[0].mxu0
    %v260 = vadd.f32 %v81, %v259
    %v261 = vpop.f32.mrb[0].mxu0
    %262 = vmatprep.mubr.bf16.mxu0 0
    %263 = vmatmul.mubr.bf16.gmra.mrb[0].mxu0 %v144
    %v264 = vpop.f32.mrb[0].mxu0
    %v265 = vadd.f32 %v81, %v264
    %v266 = vpop.f32.mrb[0].mxu0
    %v267 = vpop.f32.mrb[0].mxu0
    %v268 = vadd.f32 %v81, %v267
    %v269 = vpop.f32.mrb[0].mxu0
    %270 = vmatprep.mubr.bf16.mxu0 0
    %271 = vmatmul.mubr.bf16.gmra.mrb[0].mxu0 %v147
    %v272 = vpop.f32.mrb[0].mxu0
    %v273 = vadd.f32 %v81, %v272
    %v274 = vpop.f32.mrb[0].mxu0
    %v275 = vpop.f32.mrb[0].mxu0
    %v276 = vadd.f32 %v81, %v275
    %v277 = vpop.f32.mrb[0].mxu0
    %278 = vmatprep.mubr.bf16.mxu0 0
    %279 = vmatmul.mubr.bf16.gmra.mrb[0].mxu0 %v150
    %v280 = vpop.f32.mrb[0].mxu0
    %v281 = vadd.f32 %v81, %v280
    %v282 = vpop.f32.mrb[0].mxu0
    %v283 = vpop.f32.mrb[0].mxu0
    %v284 = vadd.f32 %v81, %v283
    %v285 = vpop.f32.mrb[0].mxu0
    %286 = vmatprep.mubr.bf16.mxu0 0
    %287 = vmatmul.mubr.bf16.gmra.mrb[0].mxu0 %v153
    %v288 = vpop.f32.mrb[0].mxu0
    %v289 = vadd.f32 %v81, %v288
    %v290 = vpop.f32.mrb[0].mxu0
    %v291 = vpop.f32.mrb[0].mxu0
    %v292 = vadd.f32 %v81, %v291
    %v293 = vpop.f32.mrb[0].mxu0
    %294 = vmatprep.mubr.bf16.mxu0 0
    %295 = vmatmul.mubr.bf16.gmra.mrb[0].mxu0 %v156
    %v296 = vpop.f32.mrb[0].mxu0
    %v297 = vadd.f32 %v81, %v296
    %v298 = vpop.f32.mrb[0].mxu0
    %v299 = vpop.f32.mrb[0].mxu0
    %v300 = vadd.f32 %v81, %v299
    %v301 = vpop.f32.mrb[0].mxu0
    %302 = vmatprep.mubr.bf16.mxu0 0
    %303 = vmatmul.mubr.bf16.gmra.mrb[0].mxu0 %v159
    %v304 = vpop.f32.mrb[0].mxu0
    %v305 = vadd.f32 %v81, %v304
    %v306 = vpop.f32.mrb[0].mxu0
    %v307 = vpop.f32.mrb[0].mxu0
    %v308 = vadd.f32 %v81, %v307
    %v309 = vpop.f32.mrb[0].mxu0
    %310 = vmatprep.mubr.bf16.mxu0 0
    %311 = vmatmul.mubr.bf16.gmra.mrb[0].mxu0 %v162
    %v312 = vpop.f32.mrb[0].mxu0
    %v313 = vadd.f32 %v81, %v312
    %v314 = vpop.f32.mrb[0].mxu0
    %v315 = vpop.f32.mrb[0].mxu0
    %v316 = vadd.f32 %v81, %v315
    %v317 = vpop.f32.mrb[0].mxu0
    %318 = vmatprep.mubr.bf16.mxu0 0
    %319 = vmatmul.mubr.bf16.gmra.mrb[0].mxu0 %v165
    %v320 = vpop.f32.mrb[0].mxu0
    %v321 = vadd.f32 %v81, %v320
    %v322 = vpop.f32.mrb[0].mxu0
    %v323 = vpop.f32.mrb[0].mxu0
    %v324 = vadd.f32 %v81, %v323
    %v325 = vpop.f32.mrb[0].mxu0
    %326 = vmatprep.mubr.bf16.mxu0 0
    %327 = vmatmul.mubr.bf16.gmra.mrb[0].mxu0 %v168
    %v328 = vpop.f32.mrb[0].mxu0
    %v329 = vadd.f32 %v81, %v328
    %v330 = vpop.f32.mrb[0].mxu0
    %v331 = vpop.f32.mrb[0].mxu0
    %v332 = vadd.f32 %v81, %v331
    %v333 = vpop.f32.mrb[0].mxu0
    %334 = vdwg.mxu0
    %v335 = vmax.f32 %v209, 0.0
    %v336 = vmax.f32 %v212, 0.0
    %v337 = vmax.f32 %v217, 0.0
    %v338 = vmax.f32 %v220, 0.0
    %v339 = vmax.f32 %v225, 0.0
    %v340 = vmax.f32 %v228, 0.0
    %v341 = vmax.f32 %v233, 0.0
    %v342 = vmax.f32 %v236, 0.0
    %v343 = vmax.f32 %v241, 0.0
    %v344 = vmax.f32 %v244, 0.0
    %v345 = vmax.f32 %v249, 0.0
    %v346 = vmax.f32 %v252, 0.0
    %v347 = vmax.f32 %v257, 0.0
    %v348 = vmax.f32 %v260, 0.0
    %v349 = vmax.f32 %v265, 0.0
    %v350 = vmax.f32 %v268, 0.0
    %v351 = vmax.f32 %v273, 0.0
    %v352 = vmax.f32 %v276, 0.0
    %v353 = vmax.f32 %v281, 0.0
    %v354 = vmax.f32 %v284, 0.0
    %v355 = vmax.f32 %v289, 0.0
    %v356 = vmax.f32 %v292, 0.0
    %v357 = vmax.f32 %v297, 0.0
    %v358 = vmax.f32 %v300, 0.0
    %v359 = vmax.f32 %v305, 0.0
    %v360 = vmax.f32 %v308, 0.0
    %v361 = vmax.f32 %v313, 0.0
    %v362 = vmax.f32 %v316, 0.0
    %v363 = vmax.f32 %v321, 0.0
    %v364 = vmax.f32 %v324, 0.0
    %v365 = vmax.f32 %v329, 0.0
    %v366 = vmax.f32 %v332, 0.0
    %399 = vrot.lane.b32.xlu0 %v335, 96
    %v400 = vpop.permute.xlu0 %399
    %401 = vrot.lane.b32.xlu0 %v336, 96
    %v402 = vpop.permute.xlu0 %401
    %403 = vrot.lane.b32.xlu0 %v337, 96
    %v404 = vpop.permute.xlu0 %403
    %405 = vrot.lane.b32.xlu0 %v338, 96
    %v406 = vpop.permute.xlu0 %405
    %407 = vrot.lane.b32.xlu0 %v339, 96
    %v408 = vpop.permute.xlu0 %407
    %409 = vrot.lane.b32.xlu0 %v340, 96
    %v410 = vpop.permute.xlu0 %409
    %411 = vrot.lane.b32.xlu0 %v341, 96
    %v412 = vpop.permute.xlu0 %411
    %413 = vrot.lane.b32.xlu0 %v342, 96
    %v414 = vpop.permute.xlu0 %413
    %415 = vrot.lane.b32.xlu0 %v343, 96
    %v416 = vpop.permute.xlu0 %415
    %417 = vrot.lane.b32.xlu0 %v344, 96
    %v418 = vpop.permute.xlu0 %417
    %419 = vrot.lane.b32.xlu0 %v345, 96
    %v420 = vpop.permute.xlu0 %419
    %421 = vrot.lane.b32.xlu0 %v346, 96
    %v422 = vpop.permute.xlu0 %421
    %423 = vrot.lane.b32.xlu0 %v347, 96
    %v424 = vpop.permute.xlu0 %423
    %425 = vrot.lane.b32.xlu0 %v348, 96
    %v426 = vpop.permute.xlu0 %425
    %427 = vrot.lane.b32.xlu0 %v349, 96
    %v428 = vpop.permute.xlu0 %427
    %429 = vrot.lane.b32.xlu0 %v350, 96
    %v430 = vpop.permute.xlu0 %429
    %431 = vrot.lane.b32.xlu0 %v351, 96
    %v432 = vpop.permute.xlu0 %431
    %433 = vrot.lane.b32.xlu0 %v352, 96
    %v434 = vpop.permute.xlu0 %433
    %435 = vrot.lane.b32.xlu0 %v353, 96
    %v436 = vpop.permute.xlu0 %435
    %437 = vrot.lane.b32.xlu0 %v354, 96
    %v438 = vpop.permute.xlu0 %437
    %439 = vrot.lane.b32.xlu0 %v355, 96
    %v440 = vpop.permute.xlu0 %439
    %441 = vrot.lane.b32.xlu0 %v356, 96
    %v442 = vpop.permute.xlu0 %441
    %443 = vrot.lane.b32.xlu0 %v357, 96
    %v444 = vpop.permute.xlu0 %443
    %445 = vrot.lane.b32.xlu0 %v358, 96
    %v446 = vpop.permute.xlu0 %445
    %447 = vrot.lane.b32.xlu0 %v359, 96
    %v448 = vpop.permute.xlu0 %447
    %449 = vrot.lane.b32.xlu0 %v360, 96
    %v450 = vpop.permute.xlu0 %449
    %451 = vrot.lane.b32.xlu0 %v361, 96
    %v452 = vpop.permute.xlu0 %451
    %453 = vrot.lane.b32.xlu0 %v362, 96
    %v454 = vpop.permute.xlu0 %453
    %455 = vrot.lane.b32.xlu0 %v363, 96
    %v456 = vpop.permute.xlu0 %455
    %457 = vrot.lane.b32.xlu0 %v364, 96
    %v458 = vpop.permute.xlu0 %457
    %459 = vrot.lane.b32.xlu0 %v365, 96
    %v460 = vpop.permute.xlu0 %459
    %461 = vrot.lane.b32.xlu0 %v366, 96
    %v462 = vpop.permute.xlu0 %461
    %v495 = vmax.f32 %v335, %v400
    %v496 = vmax.f32 %v336, %v402
    %v497 = vmax.f32 %v337, %v404
    %v498 = vmax.f32 %v338, %v406
    %v499 = vmax.f32 %v339, %v408
    %v500 = vmax.f32 %v340, %v410
    %v501 = vmax.f32 %v341, %v412
    %v502 = vmax.f32 %v342, %v414
    %v503 = vmax.f32 %v343, %v416
    %v504 = vmax.f32 %v344, %v418
    %v505 = vmax.f32 %v345, %v420
    %v506 = vmax.f32 %v346, %v422
    %v507 = vmax.f32 %v347, %v424
    %v508 = vmax.f32 %v348, %v426
    %v509 = vmax.f32 %v349, %v428
    %v510 = vmax.f32 %v350, %v430
    %v511 = vmax.f32 %v351, %v432
    %v512 = vmax.f32 %v352, %v434
    %v513 = vmax.f32 %v353, %v436
    %v514 = vmax.f32 %v354, %v438
    %v515 = vmax.f32 %v355, %v440
    %v516 = vmax.f32 %v356, %v442
    %v517 = vmax.f32 %v357, %v444
    %v518 = vmax.f32 %v358, %v446
    %v519 = vmax.f32 %v359, %v448
    %v520 = vmax.f32 %v360, %v450
    %v521 = vmax.f32 %v361, %v452
    %v522 = vmax.f32 %v362, %v454
    %v523 = vmax.f32 %v363, %v456
    %v524 = vmax.f32 %v364, %v458
    %v525 = vmax.f32 %v365, %v460
    %v526 = vmax.f32 %v366, %v462
    %559 = vrot.lane.b32.xlu0 %v495, 64
    %v560 = vpop.permute.xlu0 %559
    %561 = vrot.lane.b32.xlu0 %v496, 64
    %v562 = vpop.permute.xlu0 %561
    %563 = vrot.lane.b32.xlu0 %v497, 64
    %v564 = vpop.permute.xlu0 %563
    %565 = vrot.lane.b32.xlu0 %v498, 64
    %v566 = vpop.permute.xlu0 %565
    %567 = vrot.lane.b32.xlu0 %v499, 64
    %v568 = vpop.permute.xlu0 %567
    %569 = vrot.lane.b32.xlu0 %v500, 64
    %v570 = vpop.permute.xlu0 %569
    %571 = vrot.lane.b32.xlu0 %v501, 64
    %v572 = vpop.permute.xlu0 %571
    %573 = vrot.lane.b32.xlu0 %v502, 64
    %v574 = vpop.permute.xlu0 %573
    %575 = vrot.lane.b32.xlu0 %v503, 64
    %v576 = vpop.permute.xlu0 %575
    %577 = vrot.lane.b32.xlu0 %v504, 64
    %v578 = vpop.permute.xlu0 %577
    %579 = vrot.lane.b32.xlu0 %v505, 64
    %v580 = vpop.permute.xlu0 %579
    %581 = vrot.lane.b32.xlu0 %v506, 64
    %v582 = vpop.permute.xlu0 %581
    %583 = vrot.lane.b32.xlu0 %v507, 64
    %v584 = vpop.permute.xlu0 %583
    %585 = vrot.lane.b32.xlu0 %v508, 64
    %v586 = vpop.permute.xlu0 %585
    %587 = vrot.lane.b32.xlu0 %v509, 64
    %v588 = vpop.permute.xlu0 %587
    %589 = vrot.lane.b32.xlu0 %v510, 64
    %v590 = vpop.permute.xlu0 %589
    %591 = vrot.lane.b32.xlu0 %v511, 64
    %v592 = vpop.permute.xlu0 %591
    %593 = vrot.lane.b32.xlu0 %v512, 64
    %v594 = vpop.permute.xlu0 %593
    %595 = vrot.lane.b32.xlu0 %v513, 64
    %v596 = vpop.permute.xlu0 %595
    %597 = vrot.lane.b32.xlu0 %v514, 64
    %v598 = vpop.permute.xlu0 %597
    %599 = vrot.lane.b32.xlu0 %v515, 64
    %v600 = vpop.permute.xlu0 %599
    %601 = vrot.lane.b32.xlu0 %v516, 64
    %v602 = vpop.permute.xlu0 %601
    %603 = vrot.lane.b32.xlu0 %v517, 64
    %v604 = vpop.permute.xlu0 %603
    %605 = vrot.lane.b32.xlu0 %v518, 64
    %v606 = vpop.permute.xlu0 %605
    %607 = vrot.lane.b32.xlu0 %v519, 64
    %v608 = vpop.permute.xlu0 %607
    %609 = vrot.lane.b32.xlu0 %v520, 64
    %v610 = vpop.permute.xlu0 %609
    %611 = vrot.lane.b32.xlu0 %v521, 64
    %v612 = vpop.permute.xlu0 %611
    %613 = vrot.lane.b32.xlu0 %v522, 64
    %v614 = vpop.permute.xlu0 %613
    %615 = vrot.lane.b32.xlu0 %v523, 64
    %v616 = vpop.permute.xlu0 %615
    %617 = vrot.lane.b32.xlu0 %v524, 64
    %v618 = vpop.permute.xlu0 %617
    %619 = vrot.lane.b32.xlu0 %v525, 64
    %v620 = vpop.permute.xlu0 %619
    %621 = vrot.lane.b32.xlu0 %v526, 64
    %v622 = vpop.permute.xlu0 %621
    %v655 = vmax.f32 %v495, %v560
    %v656 = vmax.f32 %v496, %v562
    %v657 = vmax.f32 %v497, %v564
    %v658 = vmax.f32 %v498, %v566
    %v659 = vmax.f32 %v499, %v568
    %v660 = vmax.f32 %v500, %v570
    %v661 = vmax.f32 %v501, %v572
    %v662 = vmax.f32 %v502, %v574
    %v663 = vmax.f32 %v503, %v576
    %v664 = vmax.f32 %v504, %v578
    %v665 = vmax.f32 %v505, %v580
    %v666 = vmax.f32 %v506, %v582
    %v667 = vmax.f32 %v507, %v584
    %v668 = vmax.f32 %v508, %v586
    %v669 = vmax.f32 %v509, %v588
    %v670 = vmax.f32 %v510, %v590
    %v671 = vmax.f32 %v511, %v592
    %v672 = vmax.f32 %v512, %v594
    %v673 = vmax.f32 %v513, %v596
    %v674 = vmax.f32 %v514, %v598
    %v675 = vmax.f32 %v515, %v600
    %v676 = vmax.f32 %v516, %v602
    %v677 = vmax.f32 %v517, %v604
    %v678 = vmax.f32 %v518, %v606
    %v679 = vmax.f32 %v519, %v608
    %v680 = vmax.f32 %v520, %v610
    %v681 = vmax.f32 %v521, %v612
    %v682 = vmax.f32 %v522, %v614
    %v683 = vmax.f32 %v523, %v616
    %v684 = vmax.f32 %v524, %v618
    %v685 = vmax.f32 %v525, %v620
    %v686 = vmax.f32 %v526, %v622
    %v687 = vld [vmem:[%s2 + $0x8] sm:$0xff]
    %vm688 = vcmask 261120
    %v690 = vsel %vm688, %v687, 0
    %v693 = vsel %vm688, %v655, 0
    %v696 = vsel %vm688, %v656, 0
    %v699 = vsel %vm688, %v657, 0
    %v702 = vsel %vm688, %v658, 0
    %v705 = vsel %vm688, %v659, 0
    %v708 = vsel %vm688, %v660, 0
    %v711 = vsel %vm688, %v661, 0
    %v714 = vsel %vm688, %v662, 0
    %v717 = vsel %vm688, %v663, 0
    %v720 = vsel %vm688, %v664, 0
    %v723 = vsel %vm688, %v665, 0
    %v726 = vsel %vm688, %v666, 0
    %v729 = vsel %vm688, %v667, 0
    %v732 = vsel %vm688, %v668, 0
    %v735 = vsel %vm688, %v669, 0
    %v738 = vsel %vm688, %v670, 0
    %v741 = vsel %vm688, %v671, 0
    %v744 = vsel %vm688, %v672, 0
    %v747 = vsel %vm688, %v673, 0
    %v750 = vsel %vm688, %v674, 0
    %v753 = vsel %vm688, %v675, 0
    %v756 = vsel %vm688, %v676, 0
    %v759 = vsel %vm688, %v677, 0
    %v762 = vsel %vm688, %v678, 0
    %v765 = vsel %vm688, %v679, 0
    %v768 = vsel %vm688, %v680, 0
    %v771 = vsel %vm688, %v681, 0
    %v774 = vsel %vm688, %v682, 0
    %v777 = vsel %vm688, %v683, 0
    %v780 = vsel %vm688, %v684, 0
    %v783 = vsel %vm688, %v685, 0
    %v786 = vsel %vm688, %v686, 0
    %788 = vmatprep.subr.mxu0 0.0
    %789 = vmatpush1.xpose.msra.mxu0 %v693
    %790 = vmatprep.subr.mxu0 0.0
    %791 = vmatpush1.xpose.msra.mxu0 %v696
    %792 = vmatprep.subr.mxu0 0.0
    %793 = vmatpush1.xpose.msra.mxu0 %v699
    %794 = vmatprep.subr.mxu0 0.0
    %795 = vmatpush1.xpose.msra.mxu0 %v702
    %796 = vmatprep.subr.mxu0 0.0
    %797 = vmatpush1.xpose.msra.mxu0 %v705
    %798 = vmatprep.subr.mxu0 0.0
    %799 = vmatpush1.xpose.msra.mxu0 %v708
    %800 = vmatprep.subr.mxu0 0.0
    %801 = vmatpush1.xpose.msra.mxu0 %v711
    %802 = vmatprep.subr.mxu0 0.0
    %803 = vmatpush1.xpose.msra.mxu0 %v714
    %804 = vmatprep.subr.mxu0 0.0
    %805 = vmatpush1.xpose.msra.mxu0 %v717
    %806 = vmatprep.subr.mxu0 0.0
    %807 = vmatpush1.xpose.msra.mxu0 %v720
    %808 = vmatprep.subr.mxu0 0.0
    %809 = vmatpush1.xpose.msra.mxu0 %v723
    %810 = vmatprep.subr.mxu0 0.0
    %811 = vmatpush1.xpose.msra.mxu0 %v726
    %812 = vmatprep.subr.mxu0 0.0
    %813 = vmatpush1.xpose.msra.mxu0 %v729
    %814 = vmatprep.subr.mxu0 0.0
    %815 = vmatpush1.xpose.msra.mxu0 %v732
    %816 = vmatprep.subr.mxu0 0.0
    %817 = vmatpush1.xpose.msra.mxu0 %v735
    %818 = vmatprep.subr.mxu0 0.0
    %819 = vmatpush1.xpose.msra.mxu0 %v738
    %820 = vmatprep.subr.mxu0 0.0
    %821 = vmatpush1.xpose.msra.mxu0 %v741
    %822 = vmatprep.subr.mxu0 0.0
    %823 = vmatpush1.xpose.msra.mxu0 %v744
    %824 = vmatprep.subr.mxu0 0.0
    %825 = vmatpush1.xpose.msra.mxu0 %v747
    %826 = vmatprep.subr.mxu0 0.0
    %827 = vmatpush1.xpose.msra.mxu0 %v750
    %828 = vmatprep.subr.mxu0 0.0
    %829 = vmatpush1.xpose.msra.mxu0 %v753
    %830 = vmatprep.subr.mxu0 0.0
    %831 = vmatpush1.xpose.msra.mxu0 %v756
    %832 = vmatprep.subr.mxu0 0.0
    %833 = vmatpush1.xpose.msra.mxu0 %v759
    %834 = vmatprep.subr.mxu0 0.0
    %835 = vmatpush1.xpose.msra.mxu0 %v762
    %836 = vmatprep.subr.mxu0 0.0
    %837 = vmatpush1.xpose.msra.mxu0 %v765
    %838 = vmatprep.subr.mxu0 0.0
    %839 = vmatpush1.xpose.msra.mxu0 %v768
    %840 = vmatprep.subr.mxu0 0.0
    %841 = vmatpush1.xpose.msra.mxu0 %v771
    %842 = vmatprep.subr.mxu0 0.0
    %843 = vmatpush1.xpose.msra.mxu0 %v774
    %844 = vmatprep.subr.mxu0 0.0
    %845 = vmatpush1.xpose.msra.mxu0 %v777
    %846 = vmatprep.subr.mxu0 0.0
    %847 = vmatpush1.xpose.msra.mxu0 %v780
    %848 = vmatprep.subr.mxu0 0.0
    %849 = vmatpush1.xpose.msra.mxu0 %v783
    %850 = vmatprep.subr.mxu0 0.0
    %851 = vmatpush1.xpose.msra.mxu0 %v786
    %852 = vmatprep.mubr.f32.mxu0 0.0
    %853 = vmatmul.mubr.f32.gmra.mrb[0].mxu0 %v690
    %v854 = vpop.f32.mrb[0].mxu0
    %v855 = vadd.f32 0.0, %v854
    %v856 = vpop.f32.mrb[0].mxu0
    %v857 = vadd.f32 0.0, %v856
    %858 = vdwg.mxu0
    %v859 = vmul.f32 %v855, 2.0
    %v860 = vmul.f32 %v857, 2.0
    %v861 = vand.u32 2147483647, %v859
    %vm862 = vcmp.le.f32.partialorder %v861, 0.7853982
    %vm863 = vcmp.lt.s32.totalorder %v859, 0
    %v864 = vand.u32 %v859, 2139095040
    %v865 = vshrl.u32 %v864, 23
    %v866 = vsub.s32 %v865, 127
    %v867 = vand.u32 2147483647, %v859
    %v868 = vand.u32 %v867, 8388607
    %v869 = vor.u32 %v868, 8388608
    %v870 = vsub.s32 0, %v869
    %v871 = vadd.s32 %v866, 1
    %vm872 = vcmp.gt.s32.totalorder %v871, 0
    %v873 = vsel %vm872, %v871, 0
    %v874 = vshrl.u32 %v873, 5
    %v875 = vand.u32 %v873, 31
    %v876 = vsub.s32 32, %v875
    %v877 = vshrl.u32 683565275, %v876
    %v878 = vshll.u32 683565275, %v875
    %v879 = vshrl.u32 2475754826, %v876
    %v880 = vor.u32 %v878, %v879
    %v881 = vshll.u32 2475754826, %v875
    %v882 = vshrl.u32 2131351028, %v876
    %v883 = vor.u32 %v881, %v882
    %v884 = vshll.u32 2131351028, %v875
    %v885 = vshrl.u32 2102212464, %v876
    %v886 = vor.u32 %v884, %v885
    %v887 = vshll.u32 2102212464, %v875
    %v888 = vshrl.u32 920167782, %v876
    %v889 = vor.u32 %v887, %v888
    %v890 = vshll.u32 920167782, %v875
    %v891 = vshrl.u32 1326507024, %v876
    %v892 = vor.u32 %v890, %v891
    %vm893 = vcmp.lt.s32.totalorder %v874, 1
    %vm894 = vcmp.lt.s32.totalorder %v874, 2
    %vm895 = vcmp.lt.s32.totalorder %v874, 3
    %vm896 = vcmp.lt.s32.totalorder %v874, 4
    %v897 = vsel %vm893, %v877, %v880
    %v898 = vsel %vm896, %v886, 2102212464
    %v899 = vsel %vm895, %v883, %v898
    %v900 = vsel %vm894, %v897, %v899
    %v901 = vsel %vm893, %v880, %v883
    %v902 = vsel %vm896, %v889, 920167782
    %v903 = vsel %vm895, %v886, %v902
    %v904 = vsel %vm894, %v901, %v903
    %v905 = vsel %vm893, %v883, %v886
    %v906 = vsel %vm896, %v892, 1326507024
    %v907 = vsel %vm895, %v889, %v906
    %v908 = vsel %vm894, %v905, %v907
    %v909 = vshll.u32 %v869, 8
    %v910 = vmul.u32.u64.compose %v909, %v908
    %v911 = vextract.low.u32 %v910
    %v912 = vextract.high.u32 %v910
    %v913 = vmul.u32.u64.compose %v909, %v904
    %v914 = vextract.low.u32 %v913
    %v915 = vextract.high.u32 %v913
    %v916 = vmul.u32 %v909, %v900
    %v917 = vadd.s32 %v912, %v914
    %vm918 = vc.u32 %v912, %v914
    %v919 = vadd.s32 %v915, 1
    %v920 = vsel %vm918, %v919, %v915
    %v921 = vadd.s32 %v916, %v920
    %v922 = vadd.s32 %v921, 536870912
    %v923 = vshrl.u32 %v922, 30
    %v924 = vshll.u32 %v923, 30
    %v925 = vsub.s32 %v921, %v924
    %vm926 = vcmp.lt.s32.totalorder %v925, 0
    %v927 = vsub.s32 0, %v925
    %v928 = vsel %vm926, %v927, %v925
    %v929 = vclz %v928
    %v930 = vsub.s32 %v929, 2
    %vm931 = vcmp.gt.s32.totalorder 0, %v930
    %v932 = vsel %vm931, 0, %v930
    %v933 = vsub.s32 32, %v932
    %v934 = vshll.u32 %v925, %v932
    %v935 = vshrl.u32 %v917, %v933
    %v936 = vor.u32 %v934, %v935
    %v937 = vsub.s32 4294967266, %v932
    %v938 = vadd.s32 %v937, 127
    %v939 = vshll.u32 %v938, 23
    %v940 = vor.u32 4788187, %v939
    %v941 = vand.u32 2147483647, %v940
    %v943 = vcvt.s32.f32 %v936
    %v944 = vmul.f32 %v943, %v941
    %v945 = vxor.u32 %v944, 2147483648
    %v946 = vsel %vm863, %v945, %v944
    %v947 = vsub.s32 4, %v923
    %v948 = vsel %vm863, %v947, %v923
    %v949 = vsel %vm862, %v859, %v946
    %v950 = vsel %vm862, 0, %v948
    %v951 = vcosq.f32.pop %v949
    %v952 = vsinq.f32.pop %v949
    %vm953 = vweird.f32 %v859
    %v954 = vand.u32 %v950, 3
    %vm955 = vcmp.lt.s32.totalorder %v954, 2
    %vm956 = vcmp.eq.s32.totalorder %v954, 0
    %v957 = vxor.u32 %v952, 2147483648
    %v958 = vsel %vm956, %v951, %v957
    %vm959 = vcmp.eq.s32.totalorder %v954, 2
    %v960 = vxor.u32 %v951, 2147483648
    %v961 = vsel %vm959, %v960, %v952
    %v962 = vsel %vm955, %v958, %v961
    %v963 = vsel %vm953, nan, %v962
    %v964 = vand.u32 2147483647, %v860
    %vm965 = vcmp.le.f32.partialorder %v964, 0.7853982
    %vm966 = vcmp.lt.s32.totalorder %v860, 0
    %v967 = vand.u32 %v860, 2139095040
    %v968 = vshrl.u32 %v967, 23
    %v969 = vsub.s32 %v968, 127
    %v970 = vand.u32 2147483647, %v860
    %v971 = vand.u32 %v970, 8388607
    %v972 = vor.u32 %v971, 8388608
    %v973 = vsub.s32 0, %v972
    %v974 = vadd.s32 %v969, 1
    %vm975 = vcmp.gt.s32.totalorder %v974, 0
    %v976 = vsel %vm975, %v974, 0
    %v977 = vshrl.u32 %v976, 5
    %v978 = vand.u32 %v976, 31
    %v979 = vsub.s32 32, %v978
    %v980 = vshrl.u32 683565275, %v979
    %v981 = vshll.u32 683565275, %v978
    %v982 = vshrl.u32 2475754826, %v979
    %v983 = vor.u32 %v981, %v982
    %v984 = vshll.u32 2475754826, %v978
    %v985 = vshrl.u32 2131351028, %v979
    %v986 = vor.u32 %v984, %v985
    %v987 = vshll.u32 2131351028, %v978
    %v988 = vshrl.u32 2102212464, %v979
    %v989 = vor.u32 %v987, %v988
    %v990 = vshll.u32 2102212464, %v978
    %v991 = vshrl.u32 920167782, %v979
    %v992 = vor.u32 %v990, %v991
    %v993 = vshll.u32 920167782, %v978
    %v994 = vshrl.u32 1326507024, %v979
    %v995 = vor.u32 %v993, %v994
    %vm996 = vcmp.lt.s32.totalorder %v977, 1
    %vm997 = vcmp.lt.s32.totalorder %v977, 2
    %vm998 = vcmp.lt.s32.totalorder %v977, 3
    %vm999 = vcmp.lt.s32.totalorder %v977, 4
    %v1000 = vsel %vm996, %v980, %v983
    %v1001 = vsel %vm999, %v989, 2102212464
    %v1002 = vsel %vm998, %v986, %v1001
    %v1003 = vsel %vm997, %v1000, %v1002
    %v1004 = vsel %vm996, %v983, %v986
    %v1005 = vsel %vm999, %v992, 920167782
    %v1006 = vsel %vm998, %v989, %v1005
    %v1007 = vsel %vm997, %v1004, %v1006
    %v1008 = vsel %vm996, %v986, %v989
    %v1009 = vsel %vm999, %v995, 1326507024
    %v1010 = vsel %vm998, %v992, %v1009
    %v1011 = vsel %vm997, %v1008, %v1010
    %v1012 = vshll.u32 %v972, 8
    %v1013 = vmul.u32.u64.compose %v1012, %v1011
    %v1014 = vextract.low.u32 %v1013
    %v1015 = vextract.high.u32 %v1013
    %v1016 = vmul.u32.u64.compose %v1012, %v1007
    %v1017 = vextract.low.u32 %v1016
    %v1018 = vextract.high.u32 %v1016
    %v1019 = vmul.u32 %v1012, %v1003
    %v1020 = vadd.s32 %v1015, %v1017
    %vm1021 = vc.u32 %v1015, %v1017
    %v1022 = vadd.s32 %v1018, 1
    %v1023 = vsel %vm1021, %v1022, %v1018
    %v1024 = vadd.s32 %v1019, %v1023
    %v1025 = vadd.s32 %v1024, 536870912
    %v1026 = vshrl.u32 %v1025, 30
    %v1027 = vshll.u32 %v1026, 30
    %v1028 = vsub.s32 %v1024, %v1027
    %vm1029 = vcmp.lt.s32.totalorder %v1028, 0
    %v1030 = vsub.s32 0, %v1028
    %v1031 = vsel %vm1029, %v1030, %v1028
    %v1032 = vclz %v1031
    %v1033 = vsub.s32 %v1032, 2
    %vm1034 = vcmp.gt.s32.totalorder 0, %v1033
    %v1035 = vsel %vm1034, 0, %v1033
    %v1036 = vsub.s32 32, %v1035
    %v1037 = vshll.u32 %v1028, %v1035
    %v1038 = vshrl.u32 %v1020, %v1036
    %v1039 = vor.u32 %v1037, %v1038
    %v1040 = vsub.s32 4294967266, %v1035
    %v1041 = vadd.s32 %v1040, 127
    %v1042 = vshll.u32 %v1041, 23
    %v1043 = vor.u32 4788187, %v1042
    %v1044 = vand.u32 2147483647, %v1043
    %v1046 = vcvt.s32.f32 %v1039
    %v1047 = vmul.f32 %v1046, %v1044
    %v1048 = vxor.u32 %v1047, 2147483648
    %v1049 = vsel %vm966, %v1048, %v1047
    %v1050 = vsub.s32 4, %v1026
    %v1051 = vsel %vm966, %v1050, %v1026
    %v1052 = vsel %vm965, %v860, %v1049
    %v1053 = vsel %vm965, 0, %v1051
    %v1054 = vcosq.f32.pop %v1052
    %v1055 = vsinq.f32.pop %v1052
    %vm1056 = vweird.f32 %v860
    %v1057 = vand.u32 %v1053, 3
    %vm1058 = vcmp.lt.s32.totalorder %v1057, 2
    %vm1059 = vcmp.eq.s32.totalorder %v1057, 0
    %v1060 = vxor.u32 %v1055, 2147483648
    %v1061 = vsel %vm1059, %v1054, %v1060
    %vm1062 = vcmp.eq.s32.totalorder %v1057, 2
    %v1063 = vxor.u32 %v1054, 2147483648
    %v1064 = vsel %vm1062, %v1063, %v1055
    %v1065 = vsel %vm1058, %v1061, %v1064
    %v1066 = vsel %vm1056, nan, %v1065
    %v1069 = vrot.slane %v963, 1
    %v1070 = vrot.slane %v1066, 1
    %v1073 = vmul.f32 %v963, %v1069
    %v1074 = vmul.f32 %v1066, %v1070
    %v1075 = vrot.slane %v963, 2
    %v1076 = vrot.slane %v1066, 2
    %v1079 = vmul.f32 %v1073, %v1075
    %v1080 = vmul.f32 %v1074, %v1076
    %v1081 = vsub.f32 1.0, %v1079
    %v1082 = vsub.f32 1.0, %v1080
    %v1085 = vrot.slane %v1081, 7
    %v1086 = vrot.slane %v1082, 7
    %vm1089 = vcmask 1040384
    %v1090 = vsel %vm1089, %v1079, %v1085
    %v1091 = vsel %vm1089, %v1080, %v1086
    %v1094 = vcombine.low %v1090, %v1091
    %v1096 = vunpack.c.l.s4 1983009808
    %v1097 = vunpack.c.0.s8 %v1096
    %v1098 = vlaneseq
    %v1099 = vshrl.u32 %v1098, 7
    %v1100 = vsub.s32 %v1097, %v1099
    %v1101 = vrot.slane %v1094, %v1100
    %1103 = vst [vmem:[#allocation2] sm:$0xf] %v1101
    // Predicated region
    $region14: #{tpu_custom_call.1} parent=1 // pred_check
      _
    $region15: #{tpu_custom_call.1} parent=1 // pred_check_branch
      %1105 = sbr.rel (0) target = $region17
    $region16: #{tpu_custom_call.1} parent=1 // pred_region
      %s1107 = ssub.s32 64, 64
      %1108 = vsyncadd [#allocation3], %s1107
      %s1110 = sshll.u32 [#allocation2], 4
      %s1111 = int_to_ptr.vmem [resolvable:$true] %s1110
      %1113 = dma.vmem_to_hbm [thread:$0]  %s1111, 64, %s3, [#allocation3]
    $region17: #{tpu_custom_call.1} parent=1 // pred_fallthru
      _
    // Predicated region
    $region18: #{tpu_custom_call.1} parent=1 // pred_check
      _
    $region19: #{tpu_custom_call.1} parent=1 // pred_check_branch
      %1115 = sbr.rel (0) target = $region21
    $region20: #{tpu_custom_call.1} parent=1 // pred_region
      %1116 = dma.done [#allocation3], 64
    $region21: #{tpu_custom_call.1} parent=1 // pred_fallthru
      _
    %1117 = vsyncpa [#allocation3], 1

</llo_original>
